<compile_context>
chip_gen: v6e
topology: v6e:2x2x1
jax: 0.10.0
libtpu: 0.0.40
codegen_flags: <defaults>
</compile_context>

<pallas_src>
import math

import jax
import jax.numpy as jnp
from jax.experimental import pallas as pl
from jax.experimental.pallas import tpu as pltpu

_LANE = 128          # vreg lane width
_SUBLANE_BF16 = 16   # bf16 native sublane packing (16, 128)


def _round_up(x, m):
    return ((x + m - 1) // m) * m


def _vmem_capacity_bytes():
    """Per-core VMEM capacity; generation-aware with a conservative (v7x = 64 MiB) fallback."""
    try:
        info = pltpu.get_tpu_info()
        for name in ("vmem_capacity_bytes", "vmem_size_bytes", "vmem_bytes"):
            v = getattr(info, name, None)
            if v:
                return int(v)
    except Exception:
        pass
    return 64 << 20


def _plan_fc(in_features, out_classes, capacity):
    """Class-dim padding and feature (K) tiling from the VMEM budget.

    Returns (C_pad, tile_f, F_pad, num_k). num_k == 1 means W stays fully VMEM-resident
    (single-buffered); otherwise W is streamed in (tile_f, C_pad) blocks along a K axis.
    """
    C_pad = max(_LANE, _round_up(out_classes, _LANE))
    w_budget = int(capacity * 0.8) // 2          # resident W may use at most ~40% of VMEM
    if in_features * C_pad * 2 <= w_budget:
        return C_pad, in_features, in_features, 1
    # Stream W along features: tile_f must be a lane multiple (it is X's minor dim).
    tile_f = max(_LANE, (w_budget // (2 * C_pad * 2)) // _LANE * _LANE)
    F_pad = _round_up(in_features, tile_f)
    return C_pad, tile_f, F_pad, F_pad // tile_f


def _plan_b(batch, tile_f, C_pad, num_k, x_bytes, out_bytes, capacity, tile_b=None):
    """Pick tile_b from the VMEM budget; return (tile_b, vmem_limit_bytes)."""
    budget = int(capacity * 0.8)
    w_bytes = tile_f * C_pad * 2 if num_k == 1 else 2 * tile_f * C_pad * 2
    bias_bytes = 8 * C_pad * 4                                 # sublane-padded, single-buffered
    per_row = 2 * tile_f * x_bytes + 2 * C_pad * out_bytes + C_pad * 4  # X dbuf + out dbuf + acc
    slack = 2 << 20                                            # Mosaic internal scratch headroom

    if tile_b is None:
        tile_b = min(512, _round_up(batch, _SUBLANE_BF16))
        if batch > _SUBLANE_BF16:
            # Guarantee >= 2 batch programs so the "parallel" axis shards across both v7x TCs.
            tile_b = min(tile_b, _round_up(pl.cdiv(batch, 2), _SUBLANE_BF16))
    tile_b = max(_SUBLANE_BF16, _round_up(tile_b, _SUBLANE_BF16))

    avail = budget - w_bytes - bias_bytes - slack
    if avail > 0:
        max_rows = (avail // per_row) // _SUBLANE_BF16 * _SUBLANE_BF16
        tile_b = min(tile_b, max_rows) if max_rows >= _SUBLANE_BF16 else _SUBLANE_BF16

    vmem_limit = w_bytes + bias_bytes + tile_b * per_row + slack
    vmem_limit = int(min(capacity, max(32 << 20, vmem_limit)))
    return tile_b, vmem_limit


def _multiclass_kernel(x_ref, w_ref, b_ref, o_ref, acc_ref):
    k = pl.program_id(1)

    @pl.when(k == 0)
    def _():
        acc_ref[...] = jnp.zeros_like(acc_ref)

    # Partial logits: bf16 MXU operands, f32 accumulation.
    acc_ref[...] += jnp.dot(x_ref[...].astype(jnp.bfloat16), w_ref[...],
                            preferred_element_type=jnp.float32)

    @pl.when(k == pl.num_programs(1) - 1)
    def _():
        logits = acc_ref[...] + b_ref[...]        # padded classes carry bias -1e30 (f32-safe)
        m = jnp.max(logits, axis=-1, keepdims=True)
        e = jnp.exp(logits - m)                   # padded columns underflow to exactly 0
        # TODO(synk): optional bf16 exp on v6e/v7x (~2x EUP rate) for exp-bound shapes; kept
        # f32 here for v5e compatibility and accuracy parity.
        s = jnp.sum(e, axis=-1, keepdims=True)
        o_ref[...] = (e * pl.reciprocal(s, approx=True)).astype(o_ref.dtype)


def prepare_params(w, b=None):
    """One-time parameter prep (hoist to model init): pad + cast W, build padded bias row.

    w: [in_features, out_classes] (transposed torch.nn.Linear weight), b: [out_classes] or None.
    Returns (w_prepped bf16 [F_pad, C_pad], bias_row f32 [1, C_pad], out_classes).
    """
    F, C = w.shape
    C_pad, _, F_pad, _ = _plan_fc(F, C, _vmem_capacity_bytes())
    w_p = w
    if C_pad != C:
        w_p = jnp.pad(w_p, ((0, 0), (0, C_pad - C)))
    if F_pad != F:
        w_p = jnp.pad(w_p, ((0, F_pad - F), (0, 0)))          # zero rows contribute nothing
    w_p = w_p.astype(jnp.bfloat16)

    if b is None:
        b = jnp.zeros((C,), jnp.float32)                      # Linear(bias=False)
    b_row = b.reshape(1, C).astype(jnp.float32)
    if C_pad != C:
        # Padded classes get a huge negative bias so they vanish from the softmax.
        b_row = jnp.pad(b_row, ((0, 0), (0, C_pad - C)), constant_values=-1e30)
    return w_p, b_row, C


def multiclass_regressor_prepared(x, w_prepped, bias_row, out_classes, *,
                                  out_dtype=jnp.float32, tile_b=None):
    """x: [B, F] -> softmax(x @ W + b) over classes: [B, out_classes] in out_dtype."""
    B, F = x.shape
    F_pad, C_pad = w_prepped.shape
    capacity = _vmem_capacity_bytes()
    C_pad2, tile_f, F_pad2, num_k = _plan_fc(F, out_classes, capacity)
    assert (F_pad2, C_pad2) == (F_pad, C_pad), "params were prepared for a different plan"

    if F_pad != F:
        # Rare huge-F path (W streamed over K): zero-pad X's feature dim so K blocks divide F.
        x = jnp.pad(x, ((0, 0), (0, F_pad - F)))

    x_bytes = jnp.dtype(x.dtype).itemsize
    out_bytes = jnp.dtype(out_dtype).itemsize
    tile_b, vmem_limit = _plan_b(B, tile_f, C_pad, num_k, x_bytes, out_bytes, capacity,
                                 tile_b=tile_b)

    grid = (pl.cdiv(B, tile_b), num_k)     # ragged last batch block: Pallas masks output stores

    resident = {"pipeline_mode": pl.Buffered(1)} if num_k == 1 else {}
    in_specs = [
        pl.BlockSpec((tile_b, tile_f), lambda i, k: (i, k)),             # X tile
        pl.BlockSpec((tile_f, C_pad), lambda i, k: (k, 0), **resident),  # W (resident if num_k=1)
        pl.BlockSpec((1, C_pad), lambda i, k: (0, 0),
                     pipeline_mode=pl.Buffered(1)),                      # bias row, resident
    ]

    out = pl.pallas_call(
        _multiclass_kernel,
        out_shape=jax.ShapeDtypeStruct((B, C_pad), out_dtype),
        grid_spec=pltpu.PrefetchScalarGridSpec(
            num_scalar_prefetch=0,
            grid=grid,
            in_specs=in_specs,
            out_specs=pl.BlockSpec((tile_b, C_pad), lambda i, k: (i, 0)),
            scratch_shapes=[pltpu.VMEM((tile_b, C_pad), jnp.float32)],
        ),
        compiler_params=pltpu.CompilerParams(
            dimension_semantics=("parallel", "arbitrary"),
            vmem_limit_bytes=vmem_limit,
        ),
    )(x, w_prepped, bias_row)

    return out if C_pad == out_classes else out[:, :out_classes]


def multiclass_regressor(x, w, b=None, **kwargs):
    """Convenience path (preps params per call). Hoist prepare_params() to init in production."""
    w_p, b_row, C = prepare_params(w, b)
    return multiclass_regressor_prepared(x, w_p, b_row, C, **kwargs)


def init_linear_params(key, in_features, out_classes):
    """Deterministic init matching torch.nn.Linear default (uniform(-1/sqrt(in), 1/sqrt(in)))."""
    kw, kb = jax.random.split(key)
    bound = 1.0 / math.sqrt(in_features)
    # torch stores weight as [out, in]; we keep the transposed [in, out] layout for the kernel.
    w = jax.random.uniform(kw, (in_features, out_classes), jnp.float32, -bound, bound)
    b = jax.random.uniform(kb, (out_classes,), jnp.float32, -bound, bound)
    return w, b


if __name__ == "__main__":
    key = jax.random.PRNGKey(0)
    k_x, k_p = jax.random.split(key)

    # Ragged batch (30 -> two 16-row programs, no wrapper pad) + non-lane-aligned class count
    # (10 -> padded to 128 in prepare_params) exercise both masked stores and class padding.
    batch, in_features, out_classes = 30, 32, 10
    x = jax.random.normal(k_x, (batch, in_features), jnp.float32)
    w, b = init_linear_params(k_p, in_features, out_classes)

    # One-time parameter prep (hoisted out of the per-call path).
    w_p, b_row, n_classes = prepare_params(w, b)

    out = multiclass_regressor_prepared(x, w_p, b_row, n_classes)
    out = jax.block_until_ready(out)

    # Pure-JAX f32 reference: exp(log_softmax(x @ w + b, axis=1)).
    # Tolerances account for bf16 MXU operands and the approx (EUP) reciprocal.
    logits = x @ w + b
    ref = jnp.exp(jax.nn.log_softmax(logits, axis=1))
    assert out.shape == (batch, out_classes)
    assert jnp.allclose(out, ref, atol=2e-2, rtol=2e-2), float(jnp.max(jnp.abs(out - ref)))
    assert jnp.allclose(jnp.sum(out, axis=1), 1.0, atol=5e-3)

    # Convenience path (per-call prep) also runs clean and matches.
    out2 = jax.block_until_ready(multiclass_regressor(x, w, b))
    assert jnp.allclose(out2, ref, atol=2e-2, rtol=2e-2)

    print("KERNEL_OK")
</pallas_src>

<mosaic_0001>
module attributes {stable_mosaic.version = 11 : i64} {
  func.func @_multiclass_kernel(%arg0: i32, %arg1: i32, %arg2: memref<16x32xf32, #tpu.memory_space<vmem>>, %arg3: memref<32x128xbf16, #tpu.memory_space<vmem>>, %arg4: memref<1x128xf32, #tpu.memory_space<vmem>>, %arg5: memref<16x128xf32, #tpu.memory_space<vmem>>, %arg6: memref<16x128xf32, #tpu.memory_space<vmem>>) attributes {dimension_semantics = [#tpu.dimension_semantics<parallel>, #tpu.dimension_semantics<arbitrary>], iteration_bounds = array<i64: 2, 1>, scalar_prefetch = 0 : i64, scratch_operands = 1 : i64, tpu.core_type = #tpu.core_type<tc>, window_params = [{transform_indices = @transform_0, window_bounds = array<i64: 16, 32>}, {pipeline_mode = #tpu.pipeline_mode<synchronous>, transform_indices = @transform_1, window_bounds = array<i64: 32, 128>}, {pipeline_mode = #tpu.pipeline_mode<synchronous>, transform_indices = @transform_2, window_bounds = array<i64: 1, 128>}, {transform_indices = @transform_3, window_bounds = array<i64: 16, 128>}]} {
    %c0_i32 = arith.constant 0 : i32
    %0 = arith.cmpi eq, %arg1, %c0_i32 : i32
    %1 = arith.extui %0 : i1 to i32
    %c0_i32_0 = arith.constant 0 : i32
    %2 = arith.cmpi ne, %1, %c0_i32_0 : i32
    scf.if %2 {
      %cst_10 = arith.constant 0.000000e+00 : f32
      %13 = vector.broadcast %cst_10 : f32 to vector<16x128xf32>
      %c0_11 = arith.constant 0 : index
      %c0_12 = arith.constant 0 : index
      %14 = vector.load %arg6[%c0_11, %c0_12] : memref<16x128xf32, #tpu.memory_space<vmem>>, vector<16x128xf32>
      tpu.vector_store %arg6[%c0_11, %c0_12], %13 {strides = array<i32>} : memref<16x128xf32, #tpu.memory_space<vmem>>, vector<16x128xf32>,
    } else {
    }
    %c0 = arith.constant 0 : index
    %c0_1 = arith.constant 0 : index
    %3 = vector.load %arg6[%c0, %c0_1] : memref<16x128xf32, #tpu.memory_space<vmem>>, vector<16x128xf32>
    %c0_2 = arith.constant 0 : index
    %c0_3 = arith.constant 0 : index
    %4 = vector.load %arg2[%c0_2, %c0_3] : memref<16x32xf32, #tpu.memory_space<vmem>>, vector<16x32xf32>
    %5 = arith.truncf %4 : vector<16x32xf32> to vector<16x32xbf16>
    %c0_4 = arith.constant 0 : index
    %c0_5 = arith.constant 0 : index
    %6 = vector.load %arg3[%c0_4, %c0_5] : memref<32x128xbf16, #tpu.memory_space<vmem>>, vector<32x128xbf16>
    %cst = arith.constant dense<0.000000e+00> : vector<16x128xf32>
    %7 = tpu.matmul %5, %6, %cst {dimension_numbers = #tpu.dot_dimension_numbers<[1], [0], [0], [1], [0, 0, 1, 1], [], []>} : vector<16x32xbf16>, vector<32x128xbf16>, vector<16x128xf32> -> vector<16x128xf32>
    %8 = arith.addf %3, %7 : vector<16x128xf32>
    %c0_6 = arith.constant 0 : index
    %c0_7 = arith.constant 0 : index
    %9 = vector.load %arg6[%c0_6, %c0_7] : memref<16x128xf32, #tpu.memory_space<vmem>>, vector<16x128xf32>
    tpu.vector_store %arg6[%c0_6, %c0_7], %8 {strides = array<i32>} : memref<16x128xf32, #tpu.memory_space<vmem>>, vector<16x128xf32>,
    %c0_i32_8 = arith.constant 0 : i32
    %10 = arith.cmpi eq, %arg1, %c0_i32_8 : i32
    %11 = arith.extui %10 : i1 to i32
    %c0_i32_9 = arith.constant 0 : i32
    %12 = arith.cmpi ne, %11, %c0_i32_9 : i32
    scf.if %12 {
      %c0_10 = arith.constant 0 : index
      %c0_11 = arith.constant 0 : index
      %13 = vector.load %arg6[%c0_10, %c0_11] : memref<16x128xf32, #tpu.memory_space<vmem>>, vector<16x128xf32>
      %c0_12 = arith.constant 0 : index
      %c0_13 = arith.constant 0 : index
      %14 = vector.load %arg4[%c0_12, %c0_13] : memref<1x128xf32, #tpu.memory_space<vmem>>, vector<1x128xf32>
      %15 = vector.broadcast %14 : vector<1x128xf32> to vector<16x128xf32>
      %16 = arith.addf %13, %15 : vector<16x128xf32>
      %cst_14 = arith.constant dense<0xFF800000> : vector<16xf32>
      %17 = vector.multi_reduction <maximumf>, %16, %cst_14 [1] : vector<16x128xf32> to vector<16xf32>
      %18 = vector.shape_cast %17 : vector<16xf32> to vector<16x1xf32>
      %19 = vector.broadcast %18 : vector<16x1xf32> to vector<16x128xf32>
      %20 = arith.subf %16, %19 : vector<16x128xf32>
      %21 = math.exp %20 : vector<16x128xf32>
      %cst_15 = arith.constant dense<0.000000e+00> : vector<16xf32>
      %22 = vector.multi_reduction <add>, %21, %cst_15 [1] : vector<16x128xf32> to vector<16xf32>
      %23 = vector.shape_cast %22 : vector<16xf32> to vector<16x1xf32>
      %24 = tpu.reciprocal %23 {approx = true} : vector<16x1xf32> -> vector<16x1xf32>
      %25 = vector.broadcast %24 : vector<16x1xf32> to vector<16x128xf32>
      %26 = arith.mulf %21, %25 : vector<16x128xf32>
      %c0_16 = arith.constant 0 : index
      %c0_17 = arith.constant 0 : index
      %27 = vector.load %arg5[%c0_16, %c0_17] : memref<16x128xf32, #tpu.memory_space<vmem>>, vector<16x128xf32>
      tpu.vector_store %arg5[%c0_16, %c0_17], %26 {strides = array<i32>} : memref<16x128xf32, #tpu.memory_space<vmem>>, vector<16x128xf32>,
    } else {
    }
    return
  }
  func.func @transform_0(%arg0: i32, %arg1: i32) -> (i32, i32) {
    %c0_i32 = arith.constant 0 : i32
    return %arg0, %arg1 : i32, i32
  }
  func.func @transform_1(%arg0: i32, %arg1: i32) -> (i32, i32) {
    %c0_i32 = arith.constant 0 : i32
    %c0_i32_0 = arith.constant 0 : i32
    return %arg1, %c0_i32 : i32, i32
  }
  func.func @transform_2(%arg0: i32, %arg1: i32) -> (i32, i32) {
    %c0_i32 = arith.constant 0 : i32
    %c0_i32_0 = arith.constant 0 : i32
    %c0_i32_1 = arith.constant 0 : i32
    return %c0_i32, %c0_i32_0 : i32, i32
  }
  func.func @transform_3(%arg0: i32, %arg1: i32) -> (i32, i32) {
    %c0_i32 = arith.constant 0 : i32
    %c0_i32_0 = arith.constant 0 : i32
    return %arg0, %c0_i32 : i32, i32
  }
}

</mosaic_0001>

<llo_original>
// kernel: tpu_custom_call.1
$region0: #{tpu_custom_call.1}
  #allocation0 [shape = 'u32[]', space=smem, size = 0x4, offset = 0x4, fixed_abs, tag = 'smem constant byte address 0x4 - core index']
  #allocation1 [shape = 'u32[144,128]{1,0:T(1,128)}', space=vmem, size = 0x12000, scoped, tag = 'internal scratch']
  #allocation2 [shape = 'f32[16,128]{1,0:T(8,128)}', space=vmem, size = 0x2000, scoped, tag = 'scratch operand']
  %s0 = inlined_call_operand.hbm [shape: f32[30,32], index: 0, kind: input, shape index: {}]
  %s1 = inlined_call_operand.hbm [shape: bf16[32,128], index: 1, kind: input, shape index: {}]
  %s2 = inlined_call_operand.vmem [shape: f32[1,128], index: 2, kind: input, shape index: {}]
  %s3 = inlined_call_operand.hbm [shape: f32[30,128], index: 3, kind: output, shape index: {}]
  %s4 = sld [smem:[#allocation0]]
  $region61: #{tpu_custom_call.1} parent=0
    _
  %s6 = ssub.s32 1, %s4
  %s7 = scalar_select 0, %s6, %s4
  $region1: #{tpu_custom_call.1} parent=0
    #allocation3 [shape = 'u8[16384]{0}', space=vmem, size = 0x4000, scoped, tag = 'input window, operand 0']
    #allocation4 [shape = 's32[2]{0}', space=sflag, size = 0x8, scoped, tag = 'scoped memory for tpu_custom_call.1']
    #allocation5 [shape = 's32[2]{0}', space=sflag, size = 0x8, scoped, tag = 'scoped memory for tpu_custom_call.1']
    #allocation6 [shape = 'u8[8192]{0}', space=vmem, size = 0x2000, scoped, tag = 'input window, operand 1, single buffered']
    #allocation7 [shape = 's32[1]{0}', space=sflag, size = 0x4, scoped, tag = 'scoped memory for tpu_custom_call.1']
    #allocation8 [shape = 'u8[16384]{0}', space=vmem, size = 0x4000, scoped, tag = 'output window, operand 0']
    %8 = vsyncpa [#allocation4], 0
    %s9 = scalar_lea.sflag [#allocation4], 1
    %10 = vsyncpa %s9, 0
    %11 = vsyncpa [#allocation7], 0
    %12 = vsyncpa [#allocation5], 0
    %s13 = scalar_lea.sflag [#allocation5], 1
    %14 = vsyncpa %s13, 0
    loop: start=0, step=1, limit=4
    $region2: #{tpu_custom_call.1} parent=1 // loop_pre_header
      _
    $region3: #{tpu_custom_call.1} parent=1 // loop_header
      %s16 = sphi 0, %s20
      %p17 = scmp.ge.s32.totalorder %s16, 4
      %s23 = sphi 0, %s35
      %s24 = sphi 0, %s31
      %s25 = sphi 0, %s23
      %s26 = sphi 0, %s24
      %s27 = sphi 0, %s25
      %s28 = sphi 0, %s26
      %s40 = sphi 0, %s42
      %s43 = sphi 0, %s40
      %s44 = sphi 0, %s43
      %s60 = sphi 0, %s44
      %s66 = sphi 0, %s68
      %s69 = sphi 0, %s66
      %s70 = sphi 0, %s69
      %s86 = sphi 0, %s70
      %s90 = sphi 0, %s90
      %s92 = sphi 0, %s90
      %s93 = sphi 0, %s92
      %s107 = sphi 0, %s93
      %s113 = sphi 0, %s115
      %s116 = sphi 0, %s113
      %s117 = sphi 0, %s116
      %s133 = sphi 0, %s117
    $region4: #{tpu_custom_call.1} parent=1 // loop_header_branch
      %19 = sbr.rel (%p17) target = $region8
    $region5: #{tpu_custom_call.1} parent=1 // loop_body
      %s21 = ssub.s32 %s16, 1
      %s22 = ssub.s32 %s16, 2
      %s29 = sadd.s32 1, %s24
      %p30 = scmp.ge.s32.totalorder %s29, 1
      %s31 = scalar_select %p30, 0, %s29
      %s32 = sadd.s32 1, %s23
      %s33 = scalar_select %p30, %s32, %s23
      %p34 = scmp.ge.s32.totalorder %s33, 2
      %s35 = scalar_select %p34, 0, %s33
      %s36 = ssub.s32 %s23, %s35
      %s37 = ssub.s32 %s24, %s31
      %s38 = sor.u32 %s36, %s37
      %p39 = scmp.eq.s32.totalorder %s38, 0
      %s41 = sadd.s32 %s40, 1
      %s42 = scalar_select %p39, %s40, %s41
      %p45 = pneg %p39
      %p46 = scmp.eq.s32.totalorder %s16, 1
      %p47 = por %p45, %p46
      %p48 = scmp.ne.s32.totalorder %s40, %s43
      %p49 = scmp.eq.s32.totalorder %s16, 0
      %p50 = por %p48, %p49
      %p51 = scmp.ne.s32.totalorder %s40, %s43
      %p52 = scmp.eq.s32.totalorder %s21, 1
      %p53 = por %p51, %p52
      %p54 = scmp.ne.s32.totalorder %s43, %s44
      %p55 = scmp.eq.s32.totalorder %s21, 0
      %p56 = por %p54, %p55
      %p57 = scmp.ne.s32.totalorder %s43, %s44
      %p58 = scmp.eq.s32.totalorder %s22, 1
      %p59 = por %p57, %p58
      %p61 = scmp.ne.s32.totalorder %s44, %s60
      %p62 = scmp.eq.s32.totalorder %s22, 0
      %p63 = por %p61, %p62
      %s64 = ssub.s32 %s24, %s31
      %p65 = scmp.eq.s32.totalorder %s64, 0
      %s67 = sadd.s32 %s66, 1
      %s68 = scalar_select %p65, %s66, %s67
      %p71 = pneg %p65
      %p72 = scmp.eq.s32.totalorder %s16, 1
      %p73 = por %p71, %p72
      %p74 = scmp.ne.s32.totalorder %s66, %s69
      %p75 = scmp.eq.s32.totalorder %s16, 0
      %p76 = por %p74, %p75
      %p77 = scmp.ne.s32.totalorder %s66, %s69
      %p78 = scmp.eq.s32.totalorder %s21, 1
      %p79 = por %p77, %p78
      %p80 = scmp.ne.s32.totalorder %s69, %s70
      %p81 = scmp.eq.s32.totalorder %s21, 0
      %p82 = por %p80, %p81
      %p83 = scmp.ne.s32.totalorder %s69, %s70
      %p84 = scmp.eq.s32.totalorder %s22, 1
      %p85 = por %p83, %p84
      %p87 = scmp.ne.s32.totalorder %s70, %s86
      %p88 = scmp.eq.s32.totalorder %s22, 0
      %p89 = por %p87, %p88
      %s91 = sadd.s32 %s90, 1
      %p94 = scmp.eq.s32.totalorder %s16, 1
      %p95 = scmp.ne.s32.totalorder %s90, %s92
      %p96 = scmp.eq.s32.totalorder %s16, 0
      %p97 = por %p95, %p96
      %p98 = scmp.ne.s32.totalorder %s90, %s92
      %p99 = scmp.eq.s32.totalorder %s21, 1
      %p100 = por %p98, %p99
      %p101 = scmp.ne.s32.totalorder %s92, %s93
      %p102 = scmp.eq.s32.totalorder %s21, 0
      %p103 = por %p101, %p102
      %p104 = scmp.ne.s32.totalorder %s92, %s93
      %p105 = scmp.eq.s32.totalorder %s22, 1
      %p106 = por %p104, %p105
      %p108 = scmp.ne.s32.totalorder %s93, %s107
      %p109 = scmp.eq.s32.totalorder %s22, 0
      %p110 = por %p108, %p109
      %s111 = ssub.s32 %s23, %s35
      %p112 = scmp.eq.s32.totalorder %s111, 0
      %s114 = sadd.s32 %s113, 1
      %s115 = scalar_select %p112, %s113, %s114
      %p118 = pneg %p112
      %p119 = scmp.eq.s32.totalorder %s16, 1
      %p120 = por %p118, %p119
      %p121 = scmp.ne.s32.totalorder %s113, %s116
      %p122 = scmp.eq.s32.totalorder %s16, 0
      %p123 = por %p121, %p122
      %p124 = scmp.ne.s32.totalorder %s113, %s116
      %p125 = scmp.eq.s32.totalorder %s21, 1
      %p126 = por %p124, %p125
      %p127 = scmp.ne.s32.totalorder %s116, %s117
      %p128 = scmp.eq.s32.totalorder %s21, 0
      %p129 = por %p127, %p128
      %p130 = scmp.ne.s32.totalorder %s116, %s117
      %p131 = scmp.eq.s32.totalorder %s22, 1
      %p132 = por %p130, %p131
      %p134 = scmp.ne.s32.totalorder %s117, %s133
      %p135 = scmp.eq.s32.totalorder %s22, 0
      %p136 = por %p134, %p135
      %p137 = scmp.le.s32.totalorder 1, %s16
      %p138 = scmp.lt.s32.totalorder %s16, 3
      %p139 = pnand %p137, %p138
      %p140 = pneg %p139
      // Predicated region
      $region9: #{tpu_custom_call.1} parent=5 // pred_check
        _
      $region10: #{tpu_custom_call.1} parent=5 // pred_check_branch
        %142 = sbr.rel (%p139) target = $region12
      $region11: #{tpu_custom_call.1} parent=5 // pred_region
        %s143 = ssub.s32 %s16, 1
        // Predicated region
        $region13: #{tpu_custom_call.1} parent=11 // pred_check
          %p144 = pneg %p82
        $region14: #{tpu_custom_call.1} parent=11 // pred_check_branch
          %146 = sbr.rel (%p144) target = $region16
        $region15: #{tpu_custom_call.1} parent=11 // pred_region
          %s147 = smul.u32 4, %s26
          %s149 = ssub.s32 256, 256
          %150 = vsyncadd [#allocation7], %s149
          %s151 = smul.addr %s147, 64
          %s152 = scalar_lea.hbm %s1, %s151
          %s153 = sshll.u32 [#allocation6], 4
          %s154 = int_to_ptr.vmem [resolvable:$true] %s153
          %159 = dma.hbm_to_vmem [thread:$0]  %s152, 256, %s154, [#allocation7], 64, 64, 4
        $region16: #{tpu_custom_call.1} parent=11 // pred_fallthru
          _
        // Predicated region
        $region17: #{tpu_custom_call.1} parent=11 // pred_check
          %p160 = pneg %p103
        $region18: #{tpu_custom_call.1} parent=11 // pred_check_branch
          %162 = sbr.rel (%p160) target = $region20
        $region19: #{tpu_custom_call.1} parent=11 // pred_region
          _
        $region20: #{tpu_custom_call.1} parent=11 // pred_fallthru
          _
      $region12: #{tpu_custom_call.1} parent=5 // pred_fallthru
        _
      %p163 = scmp.lt.s32.totalorder %s16, 2
      // Predicated region
      $region21: #{tpu_custom_call.1} parent=5 // pred_check
        %p164 = pneg %p163
      $region22: #{tpu_custom_call.1} parent=5 // pred_check_branch
        %166 = sbr.rel (%p164) target = $region24
      $region23: #{tpu_custom_call.1} parent=5 // pred_region
        // Predicated region
        $region25: #{tpu_custom_call.1} parent=23 // pred_check
          %p167 = pneg %p50
        $region26: #{tpu_custom_call.1} parent=23 // pred_check_branch
          %169 = sbr.rel (%p167) target = $region28
        $region27: #{tpu_custom_call.1} parent=23 // pred_region
          %s170 = sand.u32 %s40, 1
          %s171 = scalar_lea.sflag [#allocation4], %s170
          %s172 = sand.u32 %s40, 1
          %s173 = smul.addr %s172, 16
          %s174 = scalar_lea.vmem [#allocation3], %s173
          %s175 = smul.u32 2, %s23
          %s177 = ssub.s32 256, 256
          %178 = vsyncadd %s171, %s177
          %s179 = sadd.s32 %s24, %s175
          %s180 = smul.addr %s179, 128
          %s181 = scalar_lea.hbm %s0, %s180
          %s182 = sshll.u32 %s174, 4
          %s183 = int_to_ptr.vmem [resolvable:$true] %s182
          %188 = dma.hbm_to_vmem [thread:$0]  %s181, 256, %s183, %s171, 128, 128, 8
        $region28: #{tpu_custom_call.1} parent=23 // pred_fallthru
          _
      $region24: #{tpu_custom_call.1} parent=5 // pred_fallthru
        _
      %p189 = scmp.le.s32.totalorder 1, %s16
      %p190 = scmp.lt.s32.totalorder %s16, 3
      %p191 = pnand %p189, %p190
      %p192 = pneg %p191
      // Predicated region
      $region29: #{tpu_custom_call.1} parent=5 // pred_check
        _
      $region30: #{tpu_custom_call.1} parent=5 // pred_check_branch
        %194 = sbr.rel (%p191) target = $region32
      $region31: #{tpu_custom_call.1} parent=5 // pred_region
        %s195 = ssub.s32 %s16, 1
        %s196 = sand.u32 %s43, 1
        %s197 = scalar_lea.sflag [#allocation4], %s196
        %s198 = sand.u32 %s43, 1
        %s199 = smul.addr %s198, 16
        %s200 = scalar_lea.vmem [#allocation3], %s199
        // Predicated region
        $region33: #{tpu_custom_call.1} parent=31 // pred_check
          %p201 = pneg %p56
        $region34: #{tpu_custom_call.1} parent=31 // pred_check_branch
          %203 = sbr.rel (%p201) target = $region36
        $region35: #{tpu_custom_call.1} parent=31 // pred_region
          %204 = dma.done %s197, 256
        $region36: #{tpu_custom_call.1} parent=31 // pred_fallthru
          _
        // Predicated region
        $region37: #{tpu_custom_call.1} parent=31 // pred_check
          %p205 = pneg %p82
        $region38: #{tpu_custom_call.1} parent=31 // pred_check_branch
          %207 = sbr.rel (%p205) target = $region40
        $region39: #{tpu_custom_call.1} parent=31 // pred_region
          %208 = dma.done [#allocation7], 256
        $region40: #{tpu_custom_call.1} parent=31 // pred_fallthru
          _
        %s209 = sand.u32 %s43, 1
        %s210 = scalar_lea.sflag [#allocation4], %s209
        %s211 = sand.u32 %s43, 1
        %s212 = smul.addr %s211, 16
        %s213 = scalar_lea.vmem [#allocation3], %s212
        %p214 = pneg %p56
        %p215 = pneg %p53
        %p216 = pneg %p82
        %p217 = pneg %p79
        %p218 = pneg %p103
        %p219 = pneg %p100
        %p220 = pneg %p129
        %p221 = pneg %p126
        %s222 = sand.u32 %s116, 1
        %s223 = scalar_lea.sflag [#allocation5], %s222
        %s224 = sand.u32 %s116, 1
        %s225 = smul.addr %s224, 16
        %s226 = scalar_lea.vmem [#allocation8], %s225
        %s227 = smul.u32 2, %s25
        %s228 = smul.u32 4, %s26
        %s229 = smul.u32 2, %s25
        %p231 = scmp.eq.s32.totalorder %s26, 0
        // Predicated region
        $region41: #{tpu_custom_call.1} parent=31 // pred_check
          %p232 = pneg %p231
        $region42: #{tpu_custom_call.1} parent=31 // pred_check_branch
          %234 = sbr.rel (%p232) target = $region44
        $region43: #{tpu_custom_call.1} parent=31 // pred_region
          %235 = vst [vmem:[#allocation2] sm:$0xff] 0.0
          %236 = vst [vmem:[#allocation2 + $0x8] sm:$0xff] 0.0
        $region44: #{tpu_custom_call.1} parent=31 // pred_fallthru
          _
        %v237 = vld [vmem:[#allocation2] sm:$0xff]
        %v238 = vld [vmem:[#allocation2 + $0x8] sm:$0xff]
        %v239 = vld [vmem:[%s200] sm:$0xff]
        %v240 = vld [vmem:[%s200 + $0x8] sm:$0xff]
        %v241 = vpack.c.bf16 %v240, %v239
        %v242 = vld [vmem:[#allocation6] sm:$0xf]
        %v243 = vld [vmem:[#allocation6 + $0x4] sm:$0xf]
        %v244 = vld [vmem:[#allocation6 + $0x8] sm:$0xf]
        %v245 = vld [vmem:[#allocation6 + $0xc] sm:$0xf]
        %v250 = vunpack.c.l.b16 %v242
        %v251 = vunpack.c.l.b16 %v243
        %v252 = vunpack.c.l.b16 %v244
        %v253 = vunpack.c.l.b16 %v245
        %v254 = vpack.c.b16 %v251, %v250
        %v255 = vpack.c.b16 %v253, %v252
        %vm258 = vcmask 261120
        %v260 = vsel %vm258, %v241, 0
        %262 = vmatprep.subr.bf16.mxu0 0
        %263 = vmatpush1.bf16.msra.mxu0 0
        %264 = vmatprep.subr.bf16.mxu0 0
        %265 = vmatpush1.bf16.msra.mxu0 0
        %266 = vmatprep.subr.bf16.mxu0 0
        %267 = vmatpush1.bf16.msra.mxu0 0
        %268 = vmatprep.subr.bf16.mxu0 0
        %269 = vmatpush1.bf16.msra.mxu0 0
        %270 = vmatprep.subr.bf16.mxu0 0
        %271 = vmatpush1.bf16.msra.mxu0 0
        %272 = vmatprep.subr.bf16.mxu0 0
        %273 = vmatpush1.bf16.msra.mxu0 0
        %274 = vmatprep.subr.bf16.mxu0 0
        %275 = vmatpush1.bf16.msra.mxu0 %v255
        %276 = vmatprep.subr.bf16.mxu0 0
        %277 = vmatpush1.bf16.msra.mxu0 %v254
        %278 = vmatprep.subr.bf16.mxu0 0
        %279 = vmatpush2.bf16.msra.mxu0 0
        %280 = vmatprep.subr.bf16.mxu0 0
        %281 = vmatpush2.bf16.msra.mxu0 0
        %282 = vmatprep.subr.bf16.mxu0 0
        %283 = vmatpush2.bf16.msra.mxu0 0
        %284 = vmatprep.subr.bf16.mxu0 0
        %285 = vmatpush2.bf16.msra.mxu0 0
        %286 = vmatprep.subr.bf16.mxu0 0
        %287 = vmatpush2.bf16.msra.mxu0 0
        %288 = vmatprep.subr.bf16.mxu0 0
        %289 = vmatpush2.bf16.msra.mxu0 0
        %290 = vmatprep.subr.bf16.mxu0 0
        %291 = vmatpush2.bf16.msra.mxu0 0
        %292 = vmatprep.subr.bf16.mxu0 0
        %293 = vmatpush2.bf16.msra.mxu0 0
        %294 = vmatprep.mubr.bf16.mxu0 0
        %295 = vmatmul.mubr.bf16.gmra.mxu0 %v260
        %v296 = vpop.f32.mrf.mxu0
        %v297 = vadd.f32 0.0, %v296
        %v298 = vpop.f32.mrf.mxu0
        %v299 = vpop.f32.mrf.mxu0
        %v300 = vadd.f32 0.0, %v299
        %v301 = vpop.f32.mrf.mxu0
        %302 = vdwg.mxu0
        %v303 = vadd.f32 %v237, %v297
        %v304 = vadd.f32 %v238, %v300
        %305 = vst [vmem:[#allocation2] sm:$0xff] %v303
        %306 = vst [vmem:[#allocation2 + $0x8] sm:$0xff] %v304
        // Predicated region
        $region45: #{tpu_custom_call.1} parent=31 // pred_check
          %p307 = pneg %p231
        $region46: #{tpu_custom_call.1} parent=31 // pred_check_branch
          %309 = sbr.rel (%p307) target = $region48
        $region47: #{tpu_custom_call.1} parent=31 // pred_region
          %v310 = vld [vmem:[#allocation2] sm:$0xff]
          %v311 = vld [vmem:[#allocation2 + $0x8] sm:$0xff]
          %v312 = vld [vmem:[%s2] sm:$0x1]
          %v314 = vlaneseq
          %v315 = vshrl.u32 %v314, 7
          %v316 = vsub.s32 0, %v315
          %v317 = vrot.slane %v312, %v316
          %v319 = vadd.f32 %v310, %v317
          %v320 = vadd.f32 %v311, %v317
          %321 = vmax.xlane.f32.xlu0 %v319
          %v322 = vpop.xlane.xlu0 %321
          %323 = vmax.xlane.f32.xlu0 %v320
          %v324 = vpop.xlane.xlu0 %323
          %v325 = vsub.f32 %v319, %v322
          %v326 = vsub.f32 %v320, %v324
          %v327 = vmul.f32 %v325, 1.442695
          %v328 = vpow.pop %v327
          %v329 = vmul.f32 %v326, 1.442695
          %v330 = vpow.pop %v329
          %331 = vadd.xlane.f32.xlu0 %v328
          %v332 = vpop.xlane.xlu0 %331
          %333 = vadd.xlane.f32.xlu0 %v330
          %v334 = vpop.xlane.xlu0 %333
          %v335 = vrcp.pop %v332
          %v336 = vrcp.pop %v334
          %v337 = vmul.f32 %v328, %v335
          %v338 = vmul.f32 %v330, %v336
          %339 = vst [vmem:[%s226] sm:$0xff] %v337
          %340 = vst [vmem:[%s226 + $0x8] sm:$0xff] %v338
        $region48: #{tpu_custom_call.1} parent=31 // pred_fallthru
          _
        %s341 = sand.u32 %s116, 1
        %s342 = scalar_lea.sflag [#allocation5], %s341
        %s343 = sand.u32 %s116, 1
        %s344 = smul.addr %s343, 16
        %s345 = scalar_lea.vmem [#allocation8], %s344
        // Predicated region
        $region49: #{tpu_custom_call.1} parent=31 // pred_check
          %p346 = pneg %p126
        $region50: #{tpu_custom_call.1} parent=31 // pred_check_branch
          %348 = sbr.rel (%p346) target = $region52
        $region51: #{tpu_custom_call.1} parent=31 // pred_region
          %s349 = smul.u32 2, %s25
          %s351 = ssub.s32 256, 256
          %352 = vsyncadd %s342, %s351
          %s353 = smul.addr %s349, 128
          %s354 = scalar_lea.hbm %s3, %s353
          %s355 = sshll.u32 %s345, 4
          %s356 = int_to_ptr.vmem [resolvable:$true] %s355
          %361 = dma.vmem_to_hbm [thread:$0]  %s356, 256, %s354, %s342, 128, 128, 8
        $region52: #{tpu_custom_call.1} parent=31 // pred_fallthru
          _
      $region32: #{tpu_custom_call.1} parent=5 // pred_fallthru
        _
      %p362 = scmp.le.s32.totalorder 2, %s16
      // Predicated region
      $region53: #{tpu_custom_call.1} parent=5 // pred_check
        %p363 = pneg %p362
      $region54: #{tpu_custom_call.1} parent=5 // pred_check_branch
        %365 = sbr.rel (%p363) target = $region56
      $region55: #{tpu_custom_call.1} parent=5 // pred_region
        %s366 = ssub.s32 %s16, 2
        // Predicated region
        $region57: #{tpu_custom_call.1} parent=55 // pred_check
          %p367 = pneg %p132
        $region58: #{tpu_custom_call.1} parent=55 // pred_check_branch
          %369 = sbr.rel (%p367) target = $region60
        $region59: #{tpu_custom_call.1} parent=55 // pred_region
          %s370 = sand.u32 %s117, 1
          %s371 = scalar_lea.sflag [#allocation5], %s370
          %s372 = sand.u32 %s117, 1
          %s373 = smul.addr %s372, 16
          %s374 = scalar_lea.vmem [#allocation8], %s373
          %375 = dma.done %s371, 256
        $region60: #{tpu_custom_call.1} parent=55 // pred_fallthru
          _
      $region56: #{tpu_custom_call.1} parent=5 // pred_fallthru
        _
    $region6: #{tpu_custom_call.1} parent=1 // loop_footer
      %s20 = sadd.s32 1, %s16
    $region7: #{tpu_custom_call.1} parent=1 // loop_footer_branch
      %15 = sbr.rel target = $region3
    $region8: #{tpu_custom_call.1} parent=1 // loop_exit
      _
    %376 = vsyncpa [#allocation4], 1
    %s377 = scalar_lea.sflag [#allocation4], 1
    %378 = vsyncpa %s377, 1
    %379 = vsyncpa [#allocation7], 1
    %380 = vsyncpa [#allocation5], 1
    %s381 = scalar_lea.sflag [#allocation5], 1
    %382 = vsyncpa %s381, 1

</llo_original>
